<compile_context>
chip_gen: v7x
topology: tpu7x:2x2x1
jax: 0.10.0
libtpu: 0.0.40
codegen_flags: <defaults>
</compile_context>

<pallas_src>
import functools

import jax
import jax.numpy as jnp
from jax.experimental import pallas as pl
from jax.experimental.pallas import tpu as pltpu


def _transition_kernel(x_ref, scale_ref, bias_ref, pool_ref, w_ref, o_ref,
                       *, n_chunks, chunk_l, chunk_lp, lane_pad):
    # x_ref:     (1, TC, L)          one batch element, TC input channels, L=H*W
    # scale_ref: (TC, 1)             folded BN scale  (gamma / sqrt(var+eps))
    # bias_ref:  (TC, 1)             folded BN bias   (beta - mean*scale)
    # pool_ref:  (chunk_l, chunk_lp) shared 0/1 block-diagonal pool block, bf16
    # w_ref:     (TCO, TC)           1x1 conv weight tile (pre-scaled 0.25), bf16
    # o_ref:     (1, TCO, Lpad)      f32 output block, resident across the c axis
    c = pl.program_id(2)

    x = x_ref[0].astype(jnp.float32)                          # (TC, L)
    # Folded BatchNorm + ReLU on the VPU (f32 path: v5e has no bf16 VALUs).
    z = jnp.maximum(x * scale_ref[...] + bias_ref[...], 0.0).astype(jnp.bfloat16)

    # Block-diagonal 2x2/stride-2 average pool: one small MXU matmul per
    # row-chunk against the shared (chunk_l, chunk_lp) 0/1 block.  Static lane
    # slices of z; the 1/4 factor is folded into the conv weight.
    pooled = []
    for r in range(n_chunks):
        z_r = z[:, r * chunk_l:(r + 1) * chunk_l]             # (TC, chunk_l)
        p_r = jnp.dot(z_r, pool_ref[...],
                      preferred_element_type=jnp.float32)     # (TC, chunk_lp)
        pooled.append(p_r.astype(jnp.bfloat16))
    if lane_pad:
        # Zero pad columns -> lane-dense (multiple-of-128) conv N dim / stores.
        pooled.append(jnp.zeros((z.shape[0], lane_pad), jnp.bfloat16))
    pooled = jnp.concatenate(pooled, axis=-1)                 # (TC, Lpad)

    # 1x1 conv: contract over the (tiled) input-channel axis on the MXU.
    part = jnp.dot(w_ref[...], pooled,
                   preferred_element_type=jnp.float32)        # (TCO, Lpad)

    @pl.when(c == 0)
    def _init():
        o_ref[0] = part

    @pl.when(c > 0)
    def _accum():
        o_ref[0] += part


def _row_chunk(h, w):
    """Rows per pool block: even divisor of H, preferring 128-aligned lanes."""
    cands = [c for c in range(2, h + 1, 2) if h % c == 0]
    aligned = [c for c in cands if (c * w) % 128 == 0]
    pool = aligned or cands        # unaligned W: static (shifted) lane slices
    for c in pool:                 # smallest chunk with a reasonable MXU N dim
        if c * w >= 128:
            return c
    return pool[-1]


def _pool_block(chunk, w):
    """(chunk*W, chunk*W/4) 0/1 block: column (i,j) sums the 2x2 window."""
    wp = w // 2
    s = jnp.arange(chunk * w)
    dst = (s // w // 2) * wp + (s % w) // 2
    return (dst[:, None] == jnp.arange((chunk // 2) * wp)[None, :]).astype(
        jnp.bfloat16)


def _channel_tile(cin, l_flat, itemsize, target_bytes=4 << 20):
    """Input-channel (contraction) tile size.

    The weight block's lane dim requires tc to be a multiple of 128 unless it
    covers all of Cin.  ~4 MiB per x block keeps double-buffered blocks plus
    the resident output far inside every generation's VMEM budget while
    letting tc reach 256+ (full MXU contraction depth on v6e/v7x) at 56x56.
    """
    if cin <= 128 or cin % 128 != 0 or cin * l_flat * itemsize <= target_bytes:
        return cin
    tc = 128
    while cin % (tc * 2) == 0 and (tc * 2) * l_flat * itemsize <= target_bytes:
        tc *= 2
    return tc


def transition_forward(x_nchw, gamma, beta, conv_w, eps=1e-5, cout_tile=None):
    """x_nchw: (N, Cin, H, W); conv_w: (Cout, Cin, 1, 1).  Returns NCHW.

    cout_tile: optional Cout tile (e.g. 128) to add a second 'parallel' unit of
    work for v7x's two TensorCores at small batch; default keeps one tile
    (avoids duplicated x reads on single-core v5e/v6e).
    """
    N, Cin, H, W = x_nchw.shape
    Cout = conv_w.shape[0]
    assert H % 2 == 0 and W % 2 == 0
    L = H * W
    Lp = L // 4

    # Keep the input dtype (bf16 stays bf16 -> half the kernel-side HBM reads);
    # the NCHW->(N, Cin, H*W) reshape is free.
    x = x_nchw.reshape(N, Cin, L)

    # Training-mode BatchNorm batch statistics folded into per-channel
    # scale/bias: one fused read pass (mean and mean-of-squares together),
    # biased variance (clamped at 0), eps like nn.BatchNorm2d in training mode.
    xf = x.astype(jnp.float32)      # fused into the reductions, not materialized
    m1 = jnp.mean(xf, axis=(0, 2))
    m2 = jnp.mean(xf * xf, axis=(0, 2))
    var = jnp.maximum(m2 - m1 * m1, 0.0)
    scale = gamma.astype(jnp.float32) / jnp.sqrt(var + eps)
    bias = beta.astype(jnp.float32) - m1 * scale
    scale2 = scale.reshape(Cin, 1)
    bias2 = bias.reshape(Cin, 1)

    # 1x1 conv weight -> (Cout, Cin); fold in the 1/4 pool factor; bf16 for MXU.
    w_mat = (conv_w.reshape(Cout, Cin).astype(jnp.float32) * 0.25).astype(
        jnp.bfloat16)

    # Block-diagonal pool: one shared (chunk*W, chunk*W/4) 0/1 block (tiny, so
    # the default double-buffering of the constant operands costs ~nothing).
    chunk = _row_chunk(H, W)
    n_chunks = H // chunk
    chunk_l = chunk * W
    chunk_lp = chunk_l // 4
    pool_blk = _pool_block(chunk, W)

    # Lane-dense output: pad the pooled spatial dim up to a multiple of 128.
    lane_pad = (-Lp) % 128
    Lpad = Lp + lane_pad

    tc = _channel_tile(Cin, L, x.dtype.itemsize)
    kc = Cin // tc
    tco = Cout
    if cout_tile is not None and Cout % cout_tile == 0:
        tco = cout_tile
    n_o = Cout // tco

    kernel = functools.partial(
        _transition_kernel, n_chunks=n_chunks, chunk_l=chunk_l,
        chunk_lp=chunk_lp, lane_pad=lane_pad)

    out_flat = pl.pallas_call(
        kernel,
        out_shape=jax.ShapeDtypeStruct((N, Cout, Lpad), jnp.float32),
        grid_spec=pltpu.PrefetchScalarGridSpec(
            num_scalar_prefetch=0,
            grid=(N, n_o, kc),                       # contraction axis last
            in_specs=[
                pl.BlockSpec((1, tc, L), lambda n, o, c: (n, c, 0)),
                pl.BlockSpec((tc, 1), lambda n, o, c: (c, 0)),
                pl.BlockSpec((tc, 1), lambda n, o, c: (c, 0)),
                pl.BlockSpec((chunk_l, chunk_lp), lambda n, o, c: (0, 0)),
                pl.BlockSpec((tco, tc), lambda n, o, c: (o, c)),
            ],
            out_specs=pl.BlockSpec((1, tco, Lpad), lambda n, o, c: (n, o, 0)),
        ),
        compiler_params=pltpu.CompilerParams(
            dimension_semantics=("parallel", "parallel", "arbitrary"),
            vmem_limit_bytes=32 * 1024 * 1024),
    )(x, scale2, bias2, pool_blk, w_mat)

    if lane_pad:
        out_flat = out_flat[..., :Lp]
    return out_flat.reshape(N, Cout, H // 2, W // 2)


def _reference(x_nchw, gamma, beta, conv_w, eps=1e-5):
    """Pure-JAX reference matching the PyTorch forward (training-mode BN)."""
    mean = jnp.mean(x_nchw, axis=(0, 2, 3), keepdims=True)
    var = jnp.var(x_nchw, axis=(0, 2, 3), keepdims=True)
    xn = (x_nchw - mean) / jnp.sqrt(var + eps)
    xn = xn * gamma[None, :, None, None] + beta[None, :, None, None]
    xn = jnp.maximum(xn, 0.0)
    w = conv_w[:, :, 0, 0]                                    # (Cout, Cin)
    y = jnp.einsum("nchw,oc->nohw", xn, w)
    N, Co, H, W = y.shape
    return y.reshape(N, Co, H // 2, 2, W // 2, 2).mean(axis=(3, 5))


if __name__ == "__main__":
    N, Cin, Cout, H, W = 2, 12, 12, 16, 16

    key = jax.random.PRNGKey(0)
    k_x, k_g, k_b, k_w = jax.random.split(key, 4)

    x = jax.random.normal(k_x, (N, Cin, H, W), dtype=jnp.float32)
    gamma = 1.0 + 0.1 * jax.random.normal(k_g, (Cin,), dtype=jnp.float32)
    beta = 0.1 * jax.random.normal(k_b, (Cin,), dtype=jnp.float32)
    conv_w = 0.1 * jax.random.normal(k_w, (Cout, Cin, 1, 1), dtype=jnp.float32)

    out = jax.jit(transition_forward)(x, gamma, beta, conv_w)
    out = jax.block_until_ready(out)

    ref = _reference(x, gamma, beta, conv_w)
    assert out.shape == (N, Cout, H // 2, W // 2)
    # bf16 MXU operands (f32 accumulation) -> slightly looser tolerance.
    err = float(jnp.max(jnp.abs(out - ref)))
    assert jnp.allclose(out, ref, atol=2e-2, rtol=2e-2), err

    print("KERNEL_OK")
</pallas_src>

<mosaic_0001>
module attributes {stable_mosaic.version = 11 : i64} {
  func.func @_transition_kernel(%arg0: i32, %arg1: i32, %arg2: i32, %arg3: memref<1x12x256xf32, #tpu.memory_space<vmem>>, %arg4: memref<12x1xf32, #tpu.memory_space<vmem>>, %arg5: memref<12x1xf32, #tpu.memory_space<vmem>>, %arg6: memref<128x32xbf16, #tpu.memory_space<vmem>>, %arg7: memref<12x12xbf16, #tpu.memory_space<vmem>>, %arg8: memref<1x12x128xf32, #tpu.memory_space<vmem>>) attributes {dimension_semantics = [#tpu.dimension_semantics<parallel>, #tpu.dimension_semantics<parallel>, #tpu.dimension_semantics<arbitrary>], iteration_bounds = array<i64: 2, 1, 1>, scalar_prefetch = 0 : i64, scratch_operands = 0 : i64, tpu.core_type = #tpu.core_type<tc>, window_params = [{transform_indices = @transform_0, window_bounds = array<i64: 1, 12, 256>}, {transform_indices = @transform_1, window_bounds = array<i64: 12, 1>}, {transform_indices = @transform_2, window_bounds = array<i64: 12, 1>}, {pipeline_mode = #tpu.pipeline_mode<synchronous>, transform_indices = @transform_3, window_bounds = array<i64: 128, 32>}, {transform_indices = @transform_4, window_bounds = array<i64: 12, 12>}, {transform_indices = @transform_5, window_bounds = array<i64: 1, 12, 128>}]} {
    %c0 = arith.constant 0 : index
    %c0_0 = arith.constant 0 : index
    %c0_1 = arith.constant 0 : index
    %0 = vector.load %arg3[%c0, %c0_0, %c0_1] : memref<1x12x256xf32, #tpu.memory_space<vmem>>, vector<1x12x256xf32>
    %1 = vector.shape_cast %0 : vector<1x12x256xf32> to vector<12x256xf32>
    %c0_2 = arith.constant 0 : index
    %c0_3 = arith.constant 0 : index
    %2 = vector.load %arg4[%c0_2, %c0_3] : memref<12x1xf32, #tpu.memory_space<vmem>>, vector<12x1xf32>
    %3 = vector.broadcast %2 : vector<12x1xf32> to vector<12x256xf32>
    %4 = arith.mulf %1, %3 : vector<12x256xf32>
    %c0_4 = arith.constant 0 : index
    %c0_5 = arith.constant 0 : index
    %5 = vector.load %arg5[%c0_4, %c0_5] : memref<12x1xf32, #tpu.memory_space<vmem>>, vector<12x1xf32>
    %6 = vector.broadcast %5 : vector<12x1xf32> to vector<12x256xf32>
    %7 = arith.addf %4, %6 : vector<12x256xf32>
    %cst = arith.constant 0.000000e+00 : f32
    %8 = vector.broadcast %cst : f32 to vector<12x256xf32>
    %9 = arith.maximumf %7, %8 : vector<12x256xf32>
    %10 = arith.truncf %9 : vector<12x256xf32> to vector<12x256xbf16>
    %11 = vector.extract_strided_slice %10 {offsets = [0, 0], sizes = [12, 128], strides = [1, 1]} : vector<12x256xbf16> to vector<12x128xbf16>
    %c0_6 = arith.constant 0 : index
    %c0_7 = arith.constant 0 : index
    %12 = vector.load %arg6[%c0_6, %c0_7] : memref<128x32xbf16, #tpu.memory_space<vmem>>, vector<128x32xbf16>
    %cst_8 = arith.constant dense<0.000000e+00> : vector<12x32xf32>
    %13 = tpu.matmul %11, %12, %cst_8 {dimension_numbers = #tpu.dot_dimension_numbers<[1], [0], [0], [1], [0, 0, 1, 1], [], []>} : vector<12x128xbf16>, vector<128x32xbf16>, vector<12x32xf32> -> vector<12x32xf32>
    %14 = arith.truncf %13 : vector<12x32xf32> to vector<12x32xbf16>
    %15 = vector.extract_strided_slice %10 {offsets = [0, 128], sizes = [12, 128], strides = [1, 1]} : vector<12x256xbf16> to vector<12x128xbf16>
    %c0_9 = arith.constant 0 : index
    %c0_10 = arith.constant 0 : index
    %16 = vector.load %arg6[%c0_9, %c0_10] : memref<128x32xbf16, #tpu.memory_space<vmem>>, vector<128x32xbf16>
    %cst_11 = arith.constant dense<0.000000e+00> : vector<12x32xf32>
    %17 = tpu.matmul %15, %16, %cst_11 {dimension_numbers = #tpu.dot_dimension_numbers<[1], [0], [0], [1], [0, 0, 1, 1], [], []>} : vector<12x128xbf16>, vector<128x32xbf16>, vector<12x32xf32> -> vector<12x32xf32>
    %18 = arith.truncf %17 : vector<12x32xf32> to vector<12x32xbf16>
    %cst_12 = arith.constant 0.000000e+00 : bf16
    %19 = vector.broadcast %cst_12 : bf16 to vector<12x64xbf16>
    %20 = tpu.concatenate %14, %18, %19 in 1 : vector<12x32xbf16>, vector<12x32xbf16>, vector<12x64xbf16> -> vector<12x128xbf16>
    %c0_13 = arith.constant 0 : index
    %c0_14 = arith.constant 0 : index
    %21 = vector.load %arg7[%c0_13, %c0_14] : memref<12x12xbf16, #tpu.memory_space<vmem>>, vector<12x12xbf16>
    %cst_15 = arith.constant dense<0.000000e+00> : vector<12x128xf32>
    %22 = tpu.matmul %21, %20, %cst_15 {dimension_numbers = #tpu.dot_dimension_numbers<[1], [0], [0], [1], [0, 0, 1, 1], [], []>} : vector<12x12xbf16>, vector<12x128xbf16>, vector<12x128xf32> -> vector<12x128xf32>
    %c0_i32 = arith.constant 0 : i32
    %23 = arith.cmpi eq, %arg2, %c0_i32 : i32
    %24 = arith.extui %23 : i1 to i32
    %c0_i32_16 = arith.constant 0 : i32
    %25 = arith.cmpi ne, %24, %c0_i32_16 : i32
    scf.if %25 {
      %c0_19 = arith.constant 0 : index
      %c0_20 = arith.constant 0 : index
      %c0_21 = arith.constant 0 : index
      %29 = vector.load %arg8[%c0_19, %c0_20, %c0_21] : memref<1x12x128xf32, #tpu.memory_space<vmem>>, vector<1x12x128xf32>
      %30 = vector.shape_cast %29 : vector<1x12x128xf32> to vector<12x128xf32>
      %31 = vector.shape_cast %22 : vector<12x128xf32> to vector<1x12x128xf32>
      tpu.vector_store %arg8[%c0_19, %c0_20, %c0_21], %31 {strides = array<i32>} : memref<1x12x128xf32, #tpu.memory_space<vmem>>, vector<1x12x128xf32>,
    } else {
    }
    %c0_i32_17 = arith.constant 0 : i32
    %26 = arith.cmpi sgt, %arg2, %c0_i32_17 : i32
    %27 = arith.extui %26 : i1 to i32
    %c0_i32_18 = arith.constant 0 : i32
    %28 = arith.cmpi ne, %27, %c0_i32_18 : i32
    scf.if %28 {
      %c0_19 = arith.constant 0 : index
      %c0_20 = arith.constant 0 : index
      %c0_21 = arith.constant 0 : index
      %29 = vector.load %arg8[%c0_19, %c0_20, %c0_21] : memref<1x12x128xf32, #tpu.memory_space<vmem>>, vector<1x12x128xf32>
      %30 = vector.shape_cast %29 : vector<1x12x128xf32> to vector<12x128xf32>
      %31 = arith.addf %30, %22 : vector<12x128xf32>
      %c0_22 = arith.constant 0 : index
      %c0_23 = arith.constant 0 : index
      %c0_24 = arith.constant 0 : index
      %32 = vector.load %arg8[%c0_22, %c0_23, %c0_24] : memref<1x12x128xf32, #tpu.memory_space<vmem>>, vector<1x12x128xf32>
      %33 = vector.shape_cast %32 : vector<1x12x128xf32> to vector<12x128xf32>
      %34 = vector.shape_cast %31 : vector<12x128xf32> to vector<1x12x128xf32>
      tpu.vector_store %arg8[%c0_22, %c0_23, %c0_24], %34 {strides = array<i32>} : memref<1x12x128xf32, #tpu.memory_space<vmem>>, vector<1x12x128xf32>,
    } else {
    }
    return
  }
  func.func @transform_0(%arg0: i32, %arg1: i32, %arg2: i32) -> (i32, i32, i32) {
    %c0_i32 = arith.constant 0 : i32
    %c0_i32_0 = arith.constant 0 : i32
    return %arg0, %arg2, %c0_i32 : i32, i32, i32
  }
  func.func @transform_1(%arg0: i32, %arg1: i32, %arg2: i32) -> (i32, i32) {
    %c0_i32 = arith.constant 0 : i32
    %c0_i32_0 = arith.constant 0 : i32
    return %arg2, %c0_i32 : i32, i32
  }
  func.func @transform_2(%arg0: i32, %arg1: i32, %arg2: i32) -> (i32, i32) {
    %c0_i32 = arith.constant 0 : i32
    %c0_i32_0 = arith.constant 0 : i32
    return %arg2, %c0_i32 : i32, i32
  }
  func.func @transform_3(%arg0: i32, %arg1: i32, %arg2: i32) -> (i32, i32) {
    %c0_i32 = arith.constant 0 : i32
    %c0_i32_0 = arith.constant 0 : i32
    %c0_i32_1 = arith.constant 0 : i32
    return %c0_i32, %c0_i32_0 : i32, i32
  }
  func.func @transform_4(%arg0: i32, %arg1: i32, %arg2: i32) -> (i32, i32) {
    %c0_i32 = arith.constant 0 : i32
    return %arg1, %arg2 : i32, i32
  }
  func.func @transform_5(%arg0: i32, %arg1: i32, %arg2: i32) -> (i32, i32, i32) {
    %c0_i32 = arith.constant 0 : i32
    %c0_i32_0 = arith.constant 0 : i32
    return %arg0, %arg1, %c0_i32 : i32, i32, i32
  }
}

</mosaic_0001>

<llo_original>
// kernel: transition_forward.1
$region0: #{transition_forward.1}
  #allocation0 [shape = 'u32[]', space=smem, size = 0x4, offset = 0x4, fixed_abs, tag = 'smem constant byte address 0x4 - core index']
  #allocation1 [shape = 'u32[144,128]{1,0:T(1,128)}', space=vmem, size = 0x12000, scoped, tag = 'internal scratch']
  %s0 = inlined_call_operand.vmem [shape: f32[2,12,256], index: 0, kind: input, shape index: {}]
  %s1 = inlined_call_operand.vmem [shape: f32[12,1], index: 1, kind: input, shape index: {}]
  %s2 = inlined_call_operand.vmem [shape: f32[12,1], index: 2, kind: input, shape index: {}]
  %s3 = inlined_call_operand.vmem [shape: bf16[128,32], index: 3, kind: input, shape index: {}]
  %s4 = inlined_call_operand.vmem [shape: bf16[12,12], index: 4, kind: input, shape index: {}]
  %s5 = inlined_call_operand.vmem [shape: f32[2,12,128], index: 5, kind: output, shape index: {}]
  %s6 = sld [smem:[#allocation0]]
  $region61: #{transition_forward.1} parent=0
    _
  %s8 = ssub.s32 1, %s6
  %s9 = scalar_select 0, %s8, %s6
  loop: start=0, step=1, limit=4
  $region2: #{transition_forward.1} parent=0 // loop_pre_header
    _
  $region3: #{transition_forward.1} parent=0 // loop_header
    %s11 = sphi 0, %s15
    %p12 = scmp.ge.s32.totalorder %s11, 4
    %s18 = sphi 0, %s37
    %s19 = sphi 0, %s33
    %s20 = sphi 0, %s29
    %s21 = sphi 0, %s18
    %s22 = sphi 0, %s19
    %s23 = sphi 0, %s20
    %s24 = sphi 0, %s21
    %s25 = sphi 0, %s22
    %s26 = sphi 0, %s23
    %s42 = sphi 0, %s44
    %s45 = sphi 0, %s42
    %s46 = sphi 0, %s45
    %s62 = sphi 0, %s46
    %s68 = sphi 0, %s70
    %s71 = sphi 0, %s68
    %s72 = sphi 0, %s71
    %s88 = sphi 0, %s72
    %s94 = sphi 0, %s96
    %s97 = sphi 0, %s94
    %s98 = sphi 0, %s97
    %s114 = sphi 0, %s98
    %s118 = sphi 0, %s118
    %s120 = sphi 0, %s118
    %s121 = sphi 0, %s120
    %s135 = sphi 0, %s121
    %s143 = sphi 0, %s145
    %s146 = sphi 0, %s143
    %s147 = sphi 0, %s146
    %s163 = sphi 0, %s147
    %s171 = sphi 0, %s173
    %s174 = sphi 0, %s171
    %s175 = sphi 0, %s174
    %s191 = sphi 0, %s175
  $region4: #{transition_forward.1} parent=0 // loop_header_branch
    %14 = sbr.rel (%p12) target = $region8
  $region5: #{transition_forward.1} parent=0 // loop_body
    %s16 = ssub.s32 %s11, 1
    %s17 = ssub.s32 %s11, 2
    %s27 = sadd.s32 1, %s20
    %p28 = scmp.ge.s32.totalorder %s27, 1
    %s29 = scalar_select %p28, 0, %s27
    %s30 = sadd.s32 1, %s19
    %s31 = scalar_select %p28, %s30, %s19
    %p32 = scmp.ge.s32.totalorder %s31, 1
    %s33 = scalar_select %p32, 0, %s31
    %s34 = sadd.s32 1, %s18
    %s35 = scalar_select %p32, %s34, %s18
    %p36 = scmp.ge.s32.totalorder %s35, 2
    %s37 = scalar_select %p36, 0, %s35
    %s38 = ssub.s32 %s18, %s37
    %s39 = ssub.s32 %s20, %s29
    %s40 = sor.u32 %s38, %s39
    %p41 = scmp.eq.s32.totalorder %s40, 0
    %s43 = sadd.s32 %s42, 1
    %s44 = scalar_select %p41, %s42, %s43
    %p47 = pneg %p41
    %p48 = scmp.eq.s32.totalorder %s11, 1
    %p49 = por %p47, %p48
    %p50 = scmp.ne.s32.totalorder %s42, %s45
    %p51 = scmp.eq.s32.totalorder %s11, 0
    %p52 = por %p50, %p51
    %p53 = scmp.ne.s32.totalorder %s42, %s45
    %p54 = scmp.eq.s32.totalorder %s16, 1
    %p55 = por %p53, %p54
    %p56 = scmp.ne.s32.totalorder %s45, %s46
    %p57 = scmp.eq.s32.totalorder %s16, 0
    %p58 = por %p56, %p57
    %p59 = scmp.ne.s32.totalorder %s45, %s46
    %p60 = scmp.eq.s32.totalorder %s17, 1
    %p61 = por %p59, %p60
    %p63 = scmp.ne.s32.totalorder %s46, %s62
    %p64 = scmp.eq.s32.totalorder %s17, 0
    %p65 = por %p63, %p64
    %s66 = ssub.s32 %s20, %s29
    %p67 = scmp.eq.s32.totalorder %s66, 0
    %s69 = sadd.s32 %s68, 1
    %s70 = scalar_select %p67, %s68, %s69
    %p73 = pneg %p67
    %p74 = scmp.eq.s32.totalorder %s11, 1
    %p75 = por %p73, %p74
    %p76 = scmp.ne.s32.totalorder %s68, %s71
    %p77 = scmp.eq.s32.totalorder %s11, 0
    %p78 = por %p76, %p77
    %p79 = scmp.ne.s32.totalorder %s68, %s71
    %p80 = scmp.eq.s32.totalorder %s16, 1
    %p81 = por %p79, %p80
    %p82 = scmp.ne.s32.totalorder %s71, %s72
    %p83 = scmp.eq.s32.totalorder %s16, 0
    %p84 = por %p82, %p83
    %p85 = scmp.ne.s32.totalorder %s71, %s72
    %p86 = scmp.eq.s32.totalorder %s17, 1
    %p87 = por %p85, %p86
    %p89 = scmp.ne.s32.totalorder %s72, %s88
    %p90 = scmp.eq.s32.totalorder %s17, 0
    %p91 = por %p89, %p90
    %s92 = ssub.s32 %s20, %s29
    %p93 = scmp.eq.s32.totalorder %s92, 0
    %s95 = sadd.s32 %s94, 1
    %s96 = scalar_select %p93, %s94, %s95
    %p99 = pneg %p93
    %p100 = scmp.eq.s32.totalorder %s11, 1
    %p101 = por %p99, %p100
    %p102 = scmp.ne.s32.totalorder %s94, %s97
    %p103 = scmp.eq.s32.totalorder %s11, 0
    %p104 = por %p102, %p103
    %p105 = scmp.ne.s32.totalorder %s94, %s97
    %p106 = scmp.eq.s32.totalorder %s16, 1
    %p107 = por %p105, %p106
    %p108 = scmp.ne.s32.totalorder %s97, %s98
    %p109 = scmp.eq.s32.totalorder %s16, 0
    %p110 = por %p108, %p109
    %p111 = scmp.ne.s32.totalorder %s97, %s98
    %p112 = scmp.eq.s32.totalorder %s17, 1
    %p113 = por %p111, %p112
    %p115 = scmp.ne.s32.totalorder %s98, %s114
    %p116 = scmp.eq.s32.totalorder %s17, 0
    %p117 = por %p115, %p116
    %s119 = sadd.s32 %s118, 1
    %p122 = scmp.eq.s32.totalorder %s11, 1
    %p123 = scmp.ne.s32.totalorder %s118, %s120
    %p124 = scmp.eq.s32.totalorder %s11, 0
    %p125 = por %p123, %p124
    %p126 = scmp.ne.s32.totalorder %s118, %s120
    %p127 = scmp.eq.s32.totalorder %s16, 1
    %p128 = por %p126, %p127
    %p129 = scmp.ne.s32.totalorder %s120, %s121
    %p130 = scmp.eq.s32.totalorder %s16, 0
    %p131 = por %p129, %p130
    %p132 = scmp.ne.s32.totalorder %s120, %s121
    %p133 = scmp.eq.s32.totalorder %s17, 1
    %p134 = por %p132, %p133
    %p136 = scmp.ne.s32.totalorder %s121, %s135
    %p137 = scmp.eq.s32.totalorder %s17, 0
    %p138 = por %p136, %p137
    %s139 = ssub.s32 %s19, %s33
    %s140 = ssub.s32 %s20, %s29
    %s141 = sor.u32 %s139, %s140
    %p142 = scmp.eq.s32.totalorder %s141, 0
    %s144 = sadd.s32 %s143, 1
    %s145 = scalar_select %p142, %s143, %s144
    %p148 = pneg %p142
    %p149 = scmp.eq.s32.totalorder %s11, 1
    %p150 = por %p148, %p149
    %p151 = scmp.ne.s32.totalorder %s143, %s146
    %p152 = scmp.eq.s32.totalorder %s11, 0
    %p153 = por %p151, %p152
    %p154 = scmp.ne.s32.totalorder %s143, %s146
    %p155 = scmp.eq.s32.totalorder %s16, 1
    %p156 = por %p154, %p155
    %p157 = scmp.ne.s32.totalorder %s146, %s147
    %p158 = scmp.eq.s32.totalorder %s16, 0
    %p159 = por %p157, %p158
    %p160 = scmp.ne.s32.totalorder %s146, %s147
    %p161 = scmp.eq.s32.totalorder %s17, 1
    %p162 = por %p160, %p161
    %p164 = scmp.ne.s32.totalorder %s147, %s163
    %p165 = scmp.eq.s32.totalorder %s17, 0
    %p166 = por %p164, %p165
    %s167 = ssub.s32 %s18, %s37
    %s168 = ssub.s32 %s19, %s33
    %s169 = sor.u32 %s167, %s168
    %p170 = scmp.eq.s32.totalorder %s169, 0
    %s172 = sadd.s32 %s171, 1
    %s173 = scalar_select %p170, %s171, %s172
    %p176 = pneg %p170
    %p177 = scmp.eq.s32.totalorder %s11, 1
    %p178 = por %p176, %p177
    %p179 = scmp.ne.s32.totalorder %s171, %s174
    %p180 = scmp.eq.s32.totalorder %s11, 0
    %p181 = por %p179, %p180
    %p182 = scmp.ne.s32.totalorder %s171, %s174
    %p183 = scmp.eq.s32.totalorder %s16, 1
    %p184 = por %p182, %p183
    %p185 = scmp.ne.s32.totalorder %s174, %s175
    %p186 = scmp.eq.s32.totalorder %s16, 0
    %p187 = por %p185, %p186
    %p188 = scmp.ne.s32.totalorder %s174, %s175
    %p189 = scmp.eq.s32.totalorder %s17, 1
    %p190 = por %p188, %p189
    %p192 = scmp.ne.s32.totalorder %s175, %s191
    %p193 = scmp.eq.s32.totalorder %s17, 0
    %p194 = por %p192, %p193
    %p195 = scmp.le.s32.totalorder 1, %s11
    %p196 = scmp.lt.s32.totalorder %s11, 3
    %p197 = pnand %p195, %p196
    %p198 = pneg %p197
    // Predicated region
    $region9: #{transition_forward.1} parent=5 // pred_check
      _
    $region10: #{transition_forward.1} parent=5 // pred_check_branch
      %200 = sbr.rel (%p197) target = $region12
    $region11: #{transition_forward.1} parent=5 // pred_region
      %s201 = ssub.s32 %s11, 1
      // Predicated region
      $region13: #{transition_forward.1} parent=11 // pred_check
        %p202 = pneg %p84
      $region14: #{transition_forward.1} parent=11 // pred_check_branch
        %204 = sbr.rel (%p202) target = $region16
      $region15: #{transition_forward.1} parent=11 // pred_region
        %s205 = smul.u32 2, %s23
        %p206 = scmp.lt.s32.totalorder %s205, 1
        %s207 = scalar_select %p206, %s205, 1
        %s208 = smul.addr %s207, 8
        %s209 = scalar_lea.vmem %s1, %s208
        %s210 = smul.u32 2, %s23
      $region16: #{transition_forward.1} parent=11 // pred_fallthru
        _
      // Predicated region
      $region17: #{transition_forward.1} parent=11 // pred_check
        %p211 = pneg %p110
      $region18: #{transition_forward.1} parent=11 // pred_check_branch
        %213 = sbr.rel (%p211) target = $region20
      $region19: #{transition_forward.1} parent=11 // pred_region
        %s214 = smul.u32 2, %s23
        %p215 = scmp.lt.s32.totalorder %s214, 1
        %s216 = scalar_select %p215, %s214, 1
        %s217 = smul.addr %s216, 8
        %s218 = scalar_lea.vmem %s2, %s217
        %s219 = smul.u32 2, %s23
      $region20: #{transition_forward.1} parent=11 // pred_fallthru
        _
      // Predicated region
      $region21: #{transition_forward.1} parent=11 // pred_check
        %p220 = pneg %p131
      $region22: #{transition_forward.1} parent=11 // pred_check_branch
        %222 = sbr.rel (%p220) target = $region24
      $region23: #{transition_forward.1} parent=11 // pred_region
        _
      $region24: #{transition_forward.1} parent=11 // pred_fallthru
        _
      // Predicated region
      $region25: #{transition_forward.1} parent=11 // pred_check
        %p223 = pneg %p159
      $region26: #{transition_forward.1} parent=11 // pred_check_branch
        %225 = sbr.rel (%p223) target = $region28
      $region27: #{transition_forward.1} parent=11 // pred_region
        %s226 = smul.u32 2, %s22
        %p227 = scmp.lt.s32.totalorder %s226, 1
        %s228 = scalar_select %p227, %s226, 1
        %p229 = scmp.lt.s32.totalorder %s23, 0
        %s230 = scalar_select %p229, %s23, 0
        %s231 = sadd.s32 %s230, %s228
        %s232 = smul.addr %s231, 4
        %s233 = scalar_lea.vmem %s4, %s232
        %s234 = smul.u32 2, %s22
      $region28: #{transition_forward.1} parent=11 // pred_fallthru
        _
    $region12: #{transition_forward.1} parent=5 // pred_fallthru
      _
    %p235 = scmp.lt.s32.totalorder %s11, 2
    // Predicated region
    $region29: #{transition_forward.1} parent=5 // pred_check
      %p236 = pneg %p235
    $region30: #{transition_forward.1} parent=5 // pred_check_branch
      %238 = sbr.rel (%p236) target = $region32
    $region31: #{transition_forward.1} parent=5 // pred_region
      // Predicated region
      $region33: #{transition_forward.1} parent=31 // pred_check
        %p239 = pneg %p52
      $region34: #{transition_forward.1} parent=31 // pred_check_branch
        %241 = sbr.rel (%p239) target = $region36
      $region35: #{transition_forward.1} parent=31 // pred_region
        %s242 = smul.u32 2, %s20
        %p243 = scmp.lt.s32.totalorder %s18, 1
        %s244 = scalar_select %p243, %s18, 1
        %p245 = scmp.lt.s32.totalorder %s242, 1
        %s246 = scalar_select %p245, %s242, 1
        %s247 = smul.addr %s246, 2
        %s248 = smul.addr %s244, 4
        %s249 = sadd.s32 %s247, %s248
        %s250 = smul.addr %s249, 8
        %s251 = scalar_lea.vmem %s0, %s250
        %s252 = smul.u32 2, %s20
      $region36: #{transition_forward.1} parent=31 // pred_fallthru
        _
    $region32: #{transition_forward.1} parent=5 // pred_fallthru
      _
    %p253 = scmp.le.s32.totalorder 1, %s11
    %p254 = scmp.lt.s32.totalorder %s11, 3
    %p255 = pnand %p253, %p254
    %p256 = pneg %p255
    // Predicated region
    $region37: #{transition_forward.1} parent=5 // pred_check
      _
    $region38: #{transition_forward.1} parent=5 // pred_check_branch
      %258 = sbr.rel (%p255) target = $region40
    $region39: #{transition_forward.1} parent=5 // pred_region
      %s259 = ssub.s32 %s11, 1
      %s260 = smul.u32 2, %s23
      %p261 = scmp.lt.s32.totalorder %s21, 1
      %s262 = scalar_select %p261, %s21, 1
      %p263 = scmp.lt.s32.totalorder %s260, 1
      %s264 = scalar_select %p263, %s260, 1
      %s265 = smul.addr %s264, 2
      %s266 = smul.addr %s262, 4
      %s267 = sadd.s32 %s265, %s266
      %s268 = smul.addr %s267, 8
      %s269 = scalar_lea.vmem %s0, %s268
      %p270 = pneg %p58
      %p271 = pneg %p55
      %s272 = smul.u32 2, %s23
      %p273 = scmp.lt.s32.totalorder %s272, 1
      %s274 = scalar_select %p273, %s272, 1
      %s275 = smul.addr %s274, 8
      %s276 = scalar_lea.vmem %s1, %s275
      %p277 = pneg %p84
      %p278 = pneg %p81
      %s279 = smul.u32 2, %s23
      %p280 = scmp.lt.s32.totalorder %s279, 1
      %s281 = scalar_select %p280, %s279, 1
      %s282 = smul.addr %s281, 8
      %s283 = scalar_lea.vmem %s2, %s282
      %p284 = pneg %p110
      %p285 = pneg %p107
      %p286 = pneg %p131
      %p287 = pneg %p128
      %s288 = smul.u32 2, %s22
      %p289 = scmp.lt.s32.totalorder %s288, 1
      %s290 = scalar_select %p289, %s288, 1
      %p291 = scmp.lt.s32.totalorder %s23, 0
      %s292 = scalar_select %p291, %s23, 0
      %s293 = sadd.s32 %s292, %s290
      %s294 = smul.addr %s293, 4
      %s295 = scalar_lea.vmem %s4, %s294
      %p296 = pneg %p159
      %p297 = pneg %p156
      %p298 = pneg %p187
      %p299 = pneg %p184
      %s300 = smul.u32 2, %s22
      %p301 = scmp.lt.s32.totalorder %s21, 1
      %s302 = scalar_select %p301, %s21, 1
      %p303 = scmp.lt.s32.totalorder %s300, 1
      %s304 = scalar_select %p303, %s300, 1
      %s305 = smul.addr %s302, 2
      %s306 = sadd.s32 %s304, %s305
      %s307 = smul.addr %s306, 8
      %s308 = scalar_lea.vmem %s5, %s307
      %s309 = smul.u32 2, %s23
      %p310 = scmp.lt.s32.totalorder %s21, 1
      %s311 = scalar_select %p310, %s21, 1
      %p312 = scmp.lt.s32.totalorder %s309, 1
      %s313 = scalar_select %p312, %s309, 1
      %s314 = smul.addr %s313, 2
      %s315 = smul.addr %s311, 4
      %s316 = sadd.s32 %s314, %s315
      %s317 = smul.addr %s316, 8
      %s318 = scalar_lea.vmem %s0, %s317
      %s319 = smul.u32 2, %s23
      %s320 = smul.u32 2, %s23
      %p321 = scmp.lt.s32.totalorder %s320, 1
      %s322 = scalar_select %p321, %s320, 1
      %s323 = smul.addr %s322, 8
      %s324 = scalar_lea.vmem %s1, %s323
      %s325 = smul.u32 2, %s23
      %s326 = smul.u32 2, %s23
      %p327 = scmp.lt.s32.totalorder %s326, 1
      %s328 = scalar_select %p327, %s326, 1
      %s329 = smul.addr %s328, 8
      %s330 = scalar_lea.vmem %s2, %s329
      %s331 = smul.u32 2, %s23
      %s332 = smul.u32 2, %s22
      %p333 = scmp.lt.s32.totalorder %s332, 1
      %s334 = scalar_select %p333, %s332, 1
      %p335 = scmp.lt.s32.totalorder %s23, 0
      %s336 = scalar_select %p335, %s23, 0
      %s337 = sadd.s32 %s336, %s334
      %s338 = smul.addr %s337, 4
      %s339 = scalar_lea.vmem %s4, %s338
      %s340 = smul.u32 2, %s22
      %s341 = smul.u32 2, %s22
      %p342 = scmp.lt.s32.totalorder %s21, 1
      %s343 = scalar_select %p342, %s21, 1
      %p344 = scmp.lt.s32.totalorder %s341, 1
      %s345 = scalar_select %p344, %s341, 1
      %s346 = smul.addr %s343, 2
      %s347 = sadd.s32 %s345, %s346
      %s348 = smul.addr %s347, 8
      %s349 = scalar_lea.vmem %s5, %s348
      %s350 = smul.u32 2, %s22
      %v352 = vld [vmem:[%s318] sm:$0xff]
      %v353 = vld [vmem:[%s318 + $0x8] sm:$0xff]
      %v354 = vld [vmem:[%s318 + $0x10] sm:$0xf]
      %v355 = vld [vmem:[%s318 + $0x18] sm:$0xf]
      %v356 = vld [vmem:[%s324] sm:$0xff]
      %v357 = vld [vmem:[%s324 + $0x8] sm:$0xf]
      %359 = vset.pattern.permute.xlu0 0
      %360 = vperm.xlu0 %359, %v356
      %v361 = vpop.permute.xlu0 %360
      %364 = vset.pattern.permute.xlu0 0
      %365 = vperm.xlu0 %364, %v357
      %v366 = vpop.permute.xlu0 %365
      %v368 = vmul.f32 %v352, %v361
      %v369 = vmul.f32 %v353, %v361
      %v370 = vmul.f32 %v354, %v366
      %v371 = vmul.f32 %v355, %v366
      %v372 = vld [vmem:[%s330] sm:$0xff]
      %v373 = vld [vmem:[%s330 + $0x8] sm:$0xf]
      %375 = vset.pattern.permute.xlu0 0
      %376 = vperm.xlu0 %375, %v372
      %v377 = vpop.permute.xlu0 %376
      %380 = vset.pattern.permute.xlu0 0
      %381 = vperm.xlu0 %380, %v373
      %v382 = vpop.permute.xlu0 %381
      %v384 = vadd.f32 %v368, %v377
      %v385 = vadd.f32 %v369, %v377
      %v386 = vadd.f32 %v370, %v382
      %v387 = vadd.f32 %v371, %v382
      %v388 = vmax.f32 %v384, 0.0
      %v389 = vmax.f32 %v385, 0.0
      %v390 = vmax.f32 %v386, 0.0
      %v391 = vmax.f32 %v387, 0.0
      %v392 = vpack.c.bf16 %v390, %v388
      %v393 = vpack.c.bf16 %v391, %v389
      %v394 = vld [vmem:[%s3] sm:$0xf]
      %v395 = vld [vmem:[%s3 + $0x4] sm:$0xf]
      %v396 = vld [vmem:[%s3 + $0x8] sm:$0xf]
      %v397 = vld [vmem:[%s3 + $0xc] sm:$0xf]
      %v398 = vld [vmem:[%s3 + $0x10] sm:$0xf]
      %v399 = vld [vmem:[%s3 + $0x14] sm:$0xf]
      %v400 = vld [vmem:[%s3 + $0x18] sm:$0xf]
      %v401 = vld [vmem:[%s3 + $0x1c] sm:$0xf]
      %v402 = vld [vmem:[%s3 + $0x20] sm:$0xf]
      %v403 = vld [vmem:[%s3 + $0x24] sm:$0xf]
      %v404 = vld [vmem:[%s3 + $0x28] sm:$0xf]
      %v405 = vld [vmem:[%s3 + $0x2c] sm:$0xf]
      %v406 = vld [vmem:[%s3 + $0x30] sm:$0xf]
      %v407 = vld [vmem:[%s3 + $0x34] sm:$0xf]
      %v408 = vld [vmem:[%s3 + $0x38] sm:$0xf]
      %v409 = vld [vmem:[%s3 + $0x3c] sm:$0xf]
      %v426 = vunpack.c.l.b16 %v394
      %v427 = vunpack.c.l.b16 %v395
      %v428 = vunpack.c.l.b16 %v396
      %v429 = vunpack.c.l.b16 %v397
      %v430 = vunpack.c.l.b16 %v398
      %v431 = vunpack.c.l.b16 %v399
      %v432 = vunpack.c.l.b16 %v400
      %v433 = vunpack.c.l.b16 %v401
      %v434 = vunpack.c.l.b16 %v402
      %v435 = vunpack.c.l.b16 %v403
      %v436 = vunpack.c.l.b16 %v404
      %v437 = vunpack.c.l.b16 %v405
      %v438 = vunpack.c.l.b16 %v406
      %v439 = vunpack.c.l.b16 %v407
      %v440 = vunpack.c.l.b16 %v408
      %v441 = vunpack.c.l.b16 %v409
      %v442 = vpack.c.b16 %v427, %v426
      %v443 = vpack.c.b16 %v429, %v428
      %v444 = vpack.c.b16 %v431, %v430
      %v445 = vpack.c.b16 %v433, %v432
      %v446 = vpack.c.b16 %v435, %v434
      %v447 = vpack.c.b16 %v437, %v436
      %v448 = vpack.c.b16 %v439, %v438
      %v449 = vpack.c.b16 %v441, %v440
      %458 = vmatprep.subr.bf16.mxu0 0
      %459 = vmatpush1.bf16.msra.mxu0 %v442
      %460 = vmatprep.subr.bf16.mxu0 0
      %461 = vmatpush1.bf16.msra.mxu0 %v443
      %462 = vmatprep.subr.bf16.mxu0 0
      %463 = vmatpush1.bf16.msra.mxu0 %v444
      %464 = vmatprep.subr.bf16.mxu0 0
      %465 = vmatpush1.bf16.msra.mxu0 %v445
      %466 = vmatprep.subr.bf16.mxu0 0
      %467 = vmatpush1.bf16.msra.mxu0 %v446
      %468 = vmatprep.subr.bf16.mxu0 0
      %469 = vmatpush1.bf16.msra.mxu0 %v447
      %470 = vmatprep.subr.bf16.mxu0 0
      %471 = vmatpush1.bf16.msra.mxu0 %v448
      %472 = vmatprep.subr.bf16.mxu0 0
      %473 = vmatpush1.bf16.msra.mxu0 %v449
      %474 = vmatprep.subr.bf16.mxu0 0
      %475 = vmatpush1.bf16.msra.mxu0 0
      %476 = vmatprep.subr.bf16.mxu0 0
      %477 = vmatpush1.bf16.msra.mxu0 0
      %478 = vmatprep.subr.bf16.mxu0 0
      %479 = vmatpush1.bf16.msra.mxu0 0
      %480 = vmatprep.subr.bf16.mxu0 0
      %481 = vmatpush1.bf16.msra.mxu0 0
      %482 = vmatprep.subr.bf16.mxu0 0
      %483 = vmatpush1.bf16.msra.mxu0 0
      %484 = vmatprep.subr.bf16.mxu0 0
      %485 = vmatpush1.bf16.msra.mxu0 0
      %486 = vmatprep.subr.bf16.mxu0 0
      %487 = vmatpush1.bf16.msra.mxu0 0
      %488 = vmatprep.subr.bf16.mxu0 0
      %489 = vmatpush1.bf16.msra.mxu0 0
      %490 = vmatprep.mubr.bf16.mxu0 0
      %491 = vmatmul.mubr.bf16.gmra.mrb[0].mxu0 %v392
      %v492 = vpop.f32.mrb[0].mxu0
      %v493 = vadd.f32 0.0, %v492
      %v494 = vpop.f32.mrb[0].mxu0
      %v495 = vpop.f32.mrb[0].mxu0
      %v496 = vadd.f32 0.0, %v495
      %v497 = vpop.f32.mrb[0].mxu0
      %498 = vdwg.mxu0
      %v499 = vpack.c.bf16 %v496, %v493
      %500 = vmatprep.subr.bf16.mxu0 0
      %501 = vmatpush1.bf16.msra.mxu0 %v442
      %502 = vmatprep.subr.bf16.mxu0 0
      %503 = vmatpush1.bf16.msra.mxu0 %v443
      %504 = vmatprep.subr.bf16.mxu0 0
      %505 = vmatpush1.bf16.msra.mxu0 %v444
      %506 = vmatprep.subr.bf16.mxu0 0
      %507 = vmatpush1.bf16.msra.mxu0 %v445
      %508 = vmatprep.subr.bf16.mxu0 0
      %509 = vmatpush1.bf16.msra.mxu0 %v446
      %510 = vmatprep.subr.bf16.mxu0 0
      %511 = vmatpush1.bf16.msra.mxu0 %v447
      %512 = vmatprep.subr.bf16.mxu0 0
      %513 = vmatpush1.bf16.msra.mxu0 %v448
      %514 = vmatprep.subr.bf16.mxu0 0
      %515 = vmatpush1.bf16.msra.mxu0 %v449
      %516 = vmatprep.subr.bf16.mxu0 0
      %517 = vmatpush1.bf16.msra.mxu0 0
      %518 = vmatprep.subr.bf16.mxu0 0
      %519 = vmatpush1.bf16.msra.mxu0 0
      %520 = vmatprep.subr.bf16.mxu0 0
      %521 = vmatpush1.bf16.msra.mxu0 0
      %522 = vmatprep.subr.bf16.mxu0 0
      %523 = vmatpush1.bf16.msra.mxu0 0
      %524 = vmatprep.subr.bf16.mxu0 0
      %525 = vmatpush1.bf16.msra.mxu0 0
      %526 = vmatprep.subr.bf16.mxu0 0
      %527 = vmatpush1.bf16.msra.mxu0 0
      %528 = vmatprep.subr.bf16.mxu0 0
      %529 = vmatpush1.bf16.msra.mxu0 0
      %530 = vmatprep.subr.bf16.mxu0 0
      %531 = vmatpush1.bf16.msra.mxu0 0
      %532 = vmatprep.mubr.bf16.mxu0 0
      %533 = vmatmul.mubr.bf16.gmra.mrb[0].mxu0 %v393
      %v534 = vpop.f32.mrb[0].mxu0
      %v535 = vadd.f32 0.0, %v534
      %v536 = vpop.f32.mrb[0].mxu0
      %v537 = vpop.f32.mrb[0].mxu0
      %v538 = vadd.f32 0.0, %v537
      %v539 = vpop.f32.mrb[0].mxu0
      %540 = vdwg.mxu0
      %v541 = vpack.c.bf16 %v538, %v535
      %543 = vrot.lane.b32.xlu0 %v541, 32
      %v544 = vpop.permute.xlu0 %543
      %vm545 = vcmask 261120
      %v548 = vsel %vm545, %v499, %v544
      %vm549 = vcmask 523264
      %v551 = vsel %vm549, %v548, 0
      %v552 = vld [vmem:[%s339] sm:$0xf]
      %v553 = vld [vmem:[%s339 + $0x4] sm:$0x3]
      %v556 = vunpack.c.l.b16 %v552
      %v557 = vunpack.c.l.b16 %v553
      %v558 = vpack.c.b16 %v557, %v556
      %vm559 = vcmask 97280
      %v561 = vsel %vm559, %v558, 0
      %vm563 = vcmask 1045504
      %v564 = vsel %vm563, %v551, 0
      %566 = vmatprep.subr.bf16.mxu0 0
      %567 = vmatpush1.bf16.msra.mxu0 %v564
      %568 = vmatprep.subr.bf16.mxu0 0
      %569 = vmatpush1.bf16.msra.mxu0 0
      %570 = vmatprep.subr.bf16.mxu0 0
      %571 = vmatpush1.bf16.msra.mxu0 0
      %572 = vmatprep.subr.bf16.mxu0 0
      %573 = vmatpush1.bf16.msra.mxu0 0
      %574 = vmatprep.subr.bf16.mxu0 0
      %575 = vmatpush1.bf16.msra.mxu0 0
      %576 = vmatprep.subr.bf16.mxu0 0
      %577 = vmatpush1.bf16.msra.mxu0 0
      %578 = vmatprep.subr.bf16.mxu0 0
      %579 = vmatpush1.bf16.msra.mxu0 0
      %580 = vmatprep.subr.bf16.mxu0 0
      %581 = vmatpush1.bf16.msra.mxu0 0
      %582 = vmatprep.subr.bf16.mxu0 0
      %583 = vmatpush1.bf16.msra.mxu0 0
      %584 = vmatprep.subr.bf16.mxu0 0
      %585 = vmatpush1.bf16.msra.mxu0 0
      %586 = vmatprep.subr.bf16.mxu0 0
      %587 = vmatpush1.bf16.msra.mxu0 0
      %588 = vmatprep.subr.bf16.mxu0 0
      %589 = vmatpush1.bf16.msra.mxu0 0
      %590 = vmatprep.subr.bf16.mxu0 0
      %591 = vmatpush1.bf16.msra.mxu0 0
      %592 = vmatprep.subr.bf16.mxu0 0
      %593 = vmatpush1.bf16.msra.mxu0 0
      %594 = vmatprep.subr.bf16.mxu0 0
      %595 = vmatpush1.bf16.msra.mxu0 0
      %596 = vmatprep.subr.bf16.mxu0 0
      %597 = vmatpush1.bf16.msra.mxu0 0
      %598 = vmatprep.mubr.bf16.mxu0 0
      %599 = vmatmul.mubr.bf16.gmra.mrb[0].mxu0 %v561
      %v600 = vpop.f32.mrb[0].mxu0
      %v601 = vadd.f32 0.0, %v600
      %v602 = vpop.f32.mrb[0].mxu0
      %v603 = vpop.f32.mrb[0].mxu0
      %v604 = vadd.f32 0.0, %v603
      %v605 = vpop.f32.mrb[0].mxu0
      %606 = vdwg.mxu0
      %p607 = scmp.eq.s32.totalorder %s23, 0
      // Predicated region
      $region41: #{transition_forward.1} parent=39 // pred_check
        %p608 = pneg %p607
      $region42: #{transition_forward.1} parent=39 // pred_check_branch
        %610 = sbr.rel (%p608) target = $region44
      $region43: #{transition_forward.1} parent=39 // pred_region
        %611 = vst [vmem:[%s349] sm:$0xff] %v601
        %612 = vst [vmem:[%s349 + $0x8] sm:$0xf] %v604
      $region44: #{transition_forward.1} parent=39 // pred_fallthru
        _
      %p613 = scmp.gt.s32.totalorder %s23, 0
      // Predicated region
      $region45: #{transition_forward.1} parent=39 // pred_check
        %p614 = pneg %p613
      $region46: #{transition_forward.1} parent=39 // pred_check_branch
        %616 = sbr.rel (%p614) target = $region48
      $region47: #{transition_forward.1} parent=39 // pred_region
        %v617 = vld [vmem:[%s349] sm:$0xff]
        %v618 = vld [vmem:[%s349 + $0x8] sm:$0xf]
        %v619 = vadd.f32 %v617, %v601
        %v620 = vadd.f32 %v618, %v604
        %621 = vst [vmem:[%s349] sm:$0xff] %v619
        %622 = vst [vmem:[%s349 + $0x8] sm:$0xf] %v620
      $region48: #{transition_forward.1} parent=39 // pred_fallthru
        _
      %s623 = smul.u32 2, %s22
      %p624 = scmp.lt.s32.totalorder %s21, 1
      %s625 = scalar_select %p624, %s21, 1
      %p626 = scmp.lt.s32.totalorder %s623, 1
      %s627 = scalar_select %p626, %s623, 1
      %s628 = smul.addr %s625, 2
      %s629 = sadd.s32 %s627, %s628
      %s630 = smul.addr %s629, 8
      %s631 = scalar_lea.vmem %s5, %s630
      // Predicated region
      $region49: #{transition_forward.1} parent=39 // pred_check
        %p632 = pneg %p184
      $region50: #{transition_forward.1} parent=39 // pred_check_branch
        %634 = sbr.rel (%p632) target = $region52
      $region51: #{transition_forward.1} parent=39 // pred_region
        %s635 = smul.u32 2, %s22
      $region52: #{transition_forward.1} parent=39 // pred_fallthru
        _
    $region40: #{transition_forward.1} parent=5 // pred_fallthru
      _
    %p636 = scmp.le.s32.totalorder 2, %s11
    // Predicated region
    $region53: #{transition_forward.1} parent=5 // pred_check
      %p637 = pneg %p636
    $region54: #{transition_forward.1} parent=5 // pred_check_branch
      %639 = sbr.rel (%p637) target = $region56
    $region55: #{transition_forward.1} parent=5 // pred_region
      %s640 = ssub.s32 %s11, 2
      // Predicated region
      $region57: #{transition_forward.1} parent=55 // pred_check
        %p641 = pneg %p190
      $region58: #{transition_forward.1} parent=55 // pred_check_branch
        %643 = sbr.rel (%p641) target = $region60
      $region59: #{transition_forward.1} parent=55 // pred_region
        %s644 = smul.u32 2, %s25
        %p645 = scmp.lt.s32.totalorder %s24, 1
        %s646 = scalar_select %p645, %s24, 1
        %p647 = scmp.lt.s32.totalorder %s644, 1
        %s648 = scalar_select %p647, %s644, 1
        %s649 = smul.addr %s646, 2
        %s650 = sadd.s32 %s648, %s649
        %s651 = smul.addr %s650, 8
        %s652 = scalar_lea.vmem %s5, %s651
      $region60: #{transition_forward.1} parent=55 // pred_fallthru
        _
    $region56: #{transition_forward.1} parent=5 // pred_fallthru
      _
  $region6: #{transition_forward.1} parent=0 // loop_footer
    %s15 = sadd.s32 1, %s11
  $region7: #{transition_forward.1} parent=0 // loop_footer_branch
    %10 = sbr.rel target = $region3
  $region8: #{transition_forward.1} parent=0 // loop_exit
    _

</llo_original>
